<compile_context>
chip_gen: v7x
topology: tpu7x:2x2x1
jax: 0.10.0
libtpu: 0.0.40
codegen_flags: <defaults>
</compile_context>

<pallas_src>
import functools

import jax
import jax.numpy as jnp
from jax import lax
from jax.experimental import pallas as pl
from jax.experimental.pallas import tpu as pltpu


# --------------------------------------------------------------------------- #
# helpers
# --------------------------------------------------------------------------- #
def _pick_tile(total, target, align):
    """Largest multiple of `align` dividing `total` that is <= target, else `total`."""
    if total <= target:
        return total
    t = (target // align) * align
    while t >= align:
        if total % t == 0:
            return t
        t -= align
    return total


def _sublane_align(dtype):
    """Sublane packing alignment: 8 for 32-bit, 16 for 16-bit, 32 for 8-bit dtypes."""
    itemsize = jnp.dtype(dtype).itemsize
    return max(8, 32 // max(itemsize, 1))


def _tpu_hints():
    """Best-effort generation probe: (vmem_capacity_bytes, tensorcores_per_chip).

    Defaults are v7x-conservative (64 MiB VMEM, 2 TCs) when the device kind is
    unknown (e.g. interpret mode), which is always a safe choice.
    """
    vmem_cap = 64 * 1024 * 1024
    num_tc = 2
    try:
        kind = (jax.devices()[0].device_kind or "").lower()
    except Exception:
        kind = ""
    single_tc_big_vmem = any(
        t in kind for t in ("v5e", "v5 lite", "v5lite", "v6e", "v6 lite", "v6lite",
                            "trillium"))
    if single_tc_big_vmem:
        vmem_cap = 128 * 1024 * 1024
        num_tc = 1
    return vmem_cap, num_tc


def _choose_bb(B, num_q, q_tile, kv_tile, D, itemsize, has_mask, num_tc, vmem_limit):
    """Largest batch-block that fits VMEM; on multi-TC chips keep >= num_tc steps."""
    for bb in range(min(B, 8), 0, -1):
        if B % bb:
            continue
        if num_tc >= 2 and bb > 1 and (B // bb) * num_q < num_tc:
            continue  # keep both TensorCores busy on v7x
        est = 2 * bb * (q_tile + 2 * kv_tile) * D * itemsize      # q/k/v (double-buffered)
        est += 2 * bb * q_tile * D * itemsize                     # output (double-buffered)
        if has_mask:
            est += 2 * bb * q_tile * kv_tile * itemsize           # mask block
        est += bb * q_tile * (D + 2) * 4                          # acc/m/l f32 scratch
        est += 2 * bb * q_tile * kv_tile * 4                      # s/e f32 temporaries
        if est <= 0.6 * vmem_limit:
            return bb
    return 1


# --------------------------------------------------------------------------- #
# kernel
# --------------------------------------------------------------------------- #
def _make_attn_kernel(scale_factor: float, keep_prob: float, has_mask: bool):
    def kernel(*refs):
        if has_mask:
            q_ref, k_ref, v_ref, mask_ref, o_ref, m_scr, l_scr, acc_scr = refs
        else:
            q_ref, k_ref, v_ref, o_ref, m_scr, l_scr, acc_scr = refs

        ki = pl.program_id(2)
        last_kv = pl.num_programs(2) - 1

        @pl.when(ki == 0)
        def _():
            m_scr[...] = jnp.full_like(m_scr, -jnp.inf)
            l_scr[...] = jnp.zeros_like(l_scr)
            acc_scr[...] = jnp.zeros_like(acc_scr)

        q = q_ref[...]            # (Bb, Tq, D) in the compute dtype
        k = k_ref[...]            # (Bb, Tk, D)
        v = v_ref[...]            # (Bb, Tk, D)

        # q @ k^T without an explicit transpose: contract the last axis of both.
        s = lax.dot_general(
            q, k,
            dimension_numbers=(((2,), (2,)), ((0,), (0,))),
            preferred_element_type=jnp.float32)          # (Bb, Tq, Tk) f32

        if scale_factor != 1.0:
            # Applied once, in f32, on the score tile: matches PyTorch's f32 logit
            # scaling and avoids re-scaling q (in bf16) on every kv step.
            s = s * jnp.float32(scale_factor)

        m_prev = m_scr[...]
        m_new = jnp.maximum(m_prev, jnp.max(s, axis=-1, keepdims=True))
        alpha = jnp.exp(m_prev - m_new)
        e = jnp.exp(s - m_new)                           # un-normalized probs
        # Softmax denominator uses the *un-dropped* e (softmax happens before dropout).
        l_scr[...] = alpha * l_scr[...] + jnp.sum(e, axis=-1, keepdims=True)

        p_mat = e.astype(v.dtype)
        if has_mask:
            # Mask applied after the cast to the (narrower) matmul dtype.
            p_mat = p_mat * mask_ref[...]

        acc_scr[...] = alpha * acc_scr[...] + lax.dot_general(
            p_mat, v,
            dimension_numbers=(((2,), (1,)), ((0,), (0,))),
            preferred_element_type=jnp.float32)          # (Bb, Tq, D)
        m_scr[...] = m_new

        @pl.when(ki == last_kv)
        def _():
            # Fold softmax normalization + dropout 1/keep_prob rescale into ONE
            # per-row rescale of the accumulator.
            denom = l_scr[...]
            if has_mask:
                denom = denom * jnp.float32(keep_prob)
            o_ref[...] = (acc_scr[...] / denom).astype(o_ref.dtype)

    return kernel


# --------------------------------------------------------------------------- #
# pallas_call wrapper
# --------------------------------------------------------------------------- #
@functools.partial(jax.jit,
                   static_argnames=("scale_factor", "dropout_p", "use_bf16_mxu"))
def _sdpa_impl(query, key, value, dropout_mask, *, scale_factor, dropout_p,
               use_bf16_mxu):
    B, Lq, D = query.shape
    Lk = key.shape[1]
    out_dtype = query.dtype

    compute_dtype = query.dtype
    if use_bf16_mxu and query.dtype == jnp.float32:
        # bf16-native MXU path for f32 callers (also halves K/V HBM traffic).
        compute_dtype = jnp.bfloat16
        query = query.astype(compute_dtype)
        key = key.astype(compute_dtype)
        value = value.astype(compute_dtype)

    has_mask = dropout_mask is not None
    if has_mask:
        dropout_mask = dropout_mask.astype(compute_dtype)   # {0, 1} keep-mask
    keep_prob = 1.0 - dropout_p

    # ---------------- generation-aware sizing ----------------
    vmem_cap, num_tc = _tpu_hints()
    big_vmem = vmem_cap >= 128 * 1024 * 1024
    q_target = 512 if big_vmem else 256
    kv_target = 1024 if big_vmem else 512
    vmem_limit = (96 if big_vmem else 48) * 1024 * 1024
    score_cap_elems = (1024 * 1024) if big_vmem else (256 * 1024)   # f32 elements

    itemsize = jnp.dtype(compute_dtype).itemsize
    q_tile = _pick_tile(Lq, q_target, _sublane_align(compute_dtype))
    # kv_tile is the lane dim of the score tile and the contraction K of P@V:
    # keep it 128-aligned (falls back to full Lk for ragged Lk).
    kv_tile = _pick_tile(Lk, kv_target, 128)

    num_q = Lq // q_tile
    bb = _choose_bb(B, num_q, q_tile, kv_tile, D, itemsize, has_mask, num_tc,
                    vmem_limit)

    # Cap the f32 score-tile working set (matters on v7x's 64 MiB VMEM).
    while bb * q_tile * kv_tile > score_cap_elems and kv_tile > 128:
        new_kv = _pick_tile(Lk, max(128, kv_tile // 2), 128)
        if new_kv >= kv_tile:
            break
        kv_tile = new_kv

    num_b = B // bb
    num_kv = Lk // kv_tile

    kernel = _make_attn_kernel(float(scale_factor), keep_prob, has_mask)

    in_specs = [
        pl.BlockSpec((bb, q_tile, D), lambda b, qi, ki: (b, qi, 0)),
        pl.BlockSpec((bb, kv_tile, D), lambda b, qi, ki: (b, ki, 0)),
        pl.BlockSpec((bb, kv_tile, D), lambda b, qi, ki: (b, ki, 0)),
    ]
    operands = [query, key, value]
    if has_mask:
        in_specs.append(
            pl.BlockSpec((bb, q_tile, kv_tile), lambda b, qi, ki: (b, qi, ki)))
        operands.append(dropout_mask)

    return pl.pallas_call(
        kernel,
        out_shape=jax.ShapeDtypeStruct((B, Lq, D), out_dtype),
        grid_spec=pltpu.PrefetchScalarGridSpec(
            num_scalar_prefetch=0,
            grid=(num_b, num_q, num_kv),
            in_specs=in_specs,
            out_specs=pl.BlockSpec((bb, q_tile, D), lambda b, qi, ki: (b, qi, 0)),
            scratch_shapes=[
                pltpu.VMEM((bb, q_tile, 1), jnp.float32),   # m: running max
                pltpu.VMEM((bb, q_tile, 1), jnp.float32),   # l: running denominator
                pltpu.VMEM((bb, q_tile, D), jnp.float32),   # acc: f32 accumulator
            ],
        ),
        compiler_params=pltpu.CompilerParams(
            dimension_semantics=("parallel", "parallel", "arbitrary"),
            vmem_limit_bytes=vmem_limit,
        ),
    )(*operands)


def sdpa_dropout(query, key, value, scale_factor=1.0, dropout_p=0.0, seed=0,
                 dropout_mask=None, use_bf16_mxu=False):
    """softmax(query @ key^T * scale) -> dropout(p) -> @ value  (PyTorch semantics)."""
    B, Lq, D = query.shape
    Lk = key.shape[1]
    assert key.shape == (B, Lk, D) and value.shape == (B, Lk, D)

    scale_factor = float(scale_factor)
    dropout_p = float(dropout_p)

    if dropout_p >= 1.0:
        # torch.nn.functional.dropout(p=1) zeroes everything: skip the kernel and
        # all K/V HBM traffic entirely (this is the module's actual configuration).
        return jnp.zeros((B, Lq, D), query.dtype)

    if dropout_p > 0.0 and dropout_mask is None:
        # Bernoulli keep-mask generated on the host side of the kernel; it is
        # streamed block-by-block, never materialized in VMEM as a full slab.
        dropout_mask = jax.random.bernoulli(
            jax.random.PRNGKey(int(seed)), 1.0 - dropout_p, (B, Lq, Lk))
    if dropout_p <= 0.0:
        dropout_mask = None

    return _sdpa_impl(query, key, value, dropout_mask,
                      scale_factor=scale_factor, dropout_p=dropout_p,
                      use_bf16_mxu=bool(use_bf16_mxu))


# --------------------------------------------------------------------------- #
# self-test
# --------------------------------------------------------------------------- #
if __name__ == "__main__":
    # Shapes from the PyTorch snippet: query (2, 4, 160), key/value (2, 128, 160)
    B, Lq, Lk, D = 2, 4, 128, 160
    scale_factor = 1.0
    dropout_p = 1.0  # as in the PyTorch module -> output is exactly zero

    k0, k1, k2, k3 = jax.random.split(jax.random.PRNGKey(0), 4)
    query = jax.random.normal(k0, (B, Lq, D), dtype=jnp.float32)
    key = jax.random.normal(k1, (B, Lk, D), dtype=jnp.float32)
    value = jax.random.normal(k2, (B, Lk, D), dtype=jnp.float32)

    # pure-JAX reference pieces
    s_ref = jnp.einsum("bqd,bkd->bqk", query, key) * scale_factor
    p_ref = jax.nn.softmax(s_ref, axis=-1)

    # 1) module configuration (p = 1): output is exactly zero, no kernel launch.
    out = jax.block_until_ready(
        sdpa_dropout(query, key, value, scale_factor, dropout_p))
    assert out.shape == (B, Lq, D)
    assert jnp.allclose(out, 0.0), "p=1 output must be all zeros"

    # 2) no dropout: exercises the full flash pipeline (matmul/softmax/matmul).
    out0 = jax.block_until_ready(
        sdpa_dropout(query, key, value, scale_factor, 0.0))
    ref0 = jnp.einsum("bqk,bkd->bqd", p_ref, value)
    assert jnp.allclose(out0, ref0, atol=5e-4, rtol=5e-4), "mismatch (p=0)"

    # 3) intermediate dropout with an explicit mask: exact check vs. the masked ref.
    keep_prob = 0.5
    mask = jax.random.bernoulli(k3, keep_prob, (B, Lq, Lk))
    outd = jax.block_until_ready(
        sdpa_dropout(query, key, value, scale_factor, 0.5, dropout_mask=mask))
    refd = jnp.einsum("bqk,bkd->bqd",
                      p_ref * mask.astype(jnp.float32) / keep_prob, value)
    assert jnp.allclose(outd, refd, atol=5e-4, rtol=5e-4), "mismatch (p=0.5)"

    # 4) bf16-MXU fast path for f32 callers: smoke test (accuracy intentionally looser).
    outb = jax.block_until_ready(
        sdpa_dropout(query, key, value, scale_factor, 0.0, use_bf16_mxu=True))
    assert outb.shape == (B, Lq, D)
    assert bool(jnp.all(jnp.isfinite(outb)))

    print("KERNEL_OK")
</pallas_src>

<mosaic_0001>
module attributes {stable_mosaic.version = 11 : i64} {
  func.func @kernel(%arg0: i32, %arg1: i32, %arg2: i32, %arg3: memref<1x4x160xf32, #tpu.memory_space<vmem>>, %arg4: memref<1x128x160xf32, #tpu.memory_space<vmem>>, %arg5: memref<1x128x160xf32, #tpu.memory_space<vmem>>, %arg6: memref<1x4x160xf32, #tpu.memory_space<vmem>>, %arg7: memref<1x4x1xf32, #tpu.memory_space<vmem>>, %arg8: memref<1x4x1xf32, #tpu.memory_space<vmem>>, %arg9: memref<1x4x160xf32, #tpu.memory_space<vmem>>) attributes {dimension_semantics = [#tpu.dimension_semantics<parallel>, #tpu.dimension_semantics<parallel>, #tpu.dimension_semantics<arbitrary>], iteration_bounds = array<i64: 2, 1, 1>, scalar_prefetch = 0 : i64, scratch_operands = 3 : i64, tpu.core_type = #tpu.core_type<tc>, window_params = [{transform_indices = @transform_0, window_bounds = array<i64: 1, 4, 160>}, {transform_indices = @transform_1, window_bounds = array<i64: 1, 128, 160>}, {transform_indices = @transform_2, window_bounds = array<i64: 1, 128, 160>}, {transform_indices = @transform_3, window_bounds = array<i64: 1, 4, 160>}]} {
    %c0_i32 = arith.constant 0 : i32
    %0 = arith.cmpi eq, %arg2, %c0_i32 : i32
    %1 = arith.extui %0 : i1 to i32
    %c0_i32_0 = arith.constant 0 : i32
    %2 = arith.cmpi ne, %1, %c0_i32_0 : i32
    scf.if %2 {
      %cst_32 = arith.constant 0xFF800000 : f32
      %32 = vector.broadcast %cst_32 : f32 to vector<1x4x1xf32>
      %c0_33 = arith.constant 0 : index
      %c0_34 = arith.constant 0 : index
      %c0_35 = arith.constant 0 : index
      %33 = vector.load %arg7[%c0_33, %c0_34, %c0_35] : memref<1x4x1xf32, #tpu.memory_space<vmem>>, vector<1x4x1xf32>
      tpu.vector_store %arg7[%c0_33, %c0_34, %c0_35], %32 {strides = array<i32>} : memref<1x4x1xf32, #tpu.memory_space<vmem>>, vector<1x4x1xf32>,
      %cst_36 = arith.constant 0.000000e+00 : f32
      %34 = vector.broadcast %cst_36 : f32 to vector<1x4x1xf32>
      %c0_37 = arith.constant 0 : index
      %c0_38 = arith.constant 0 : index
      %c0_39 = arith.constant 0 : index
      %35 = vector.load %arg8[%c0_37, %c0_38, %c0_39] : memref<1x4x1xf32, #tpu.memory_space<vmem>>, vector<1x4x1xf32>
      tpu.vector_store %arg8[%c0_37, %c0_38, %c0_39], %34 {strides = array<i32>} : memref<1x4x1xf32, #tpu.memory_space<vmem>>, vector<1x4x1xf32>,
      %cst_40 = arith.constant 0.000000e+00 : f32
      %36 = vector.broadcast %cst_40 : f32 to vector<1x4x160xf32>
      %c0_41 = arith.constant 0 : index
      %c0_42 = arith.constant 0 : index
      %c0_43 = arith.constant 0 : index
      %37 = vector.load %arg9[%c0_41, %c0_42, %c0_43] : memref<1x4x160xf32, #tpu.memory_space<vmem>>, vector<1x4x160xf32>
      tpu.vector_store %arg9[%c0_41, %c0_42, %c0_43], %36 {strides = array<i32>} : memref<1x4x160xf32, #tpu.memory_space<vmem>>, vector<1x4x160xf32>,
    } else {
    }
    %c0 = arith.constant 0 : index
    %c0_1 = arith.constant 0 : index
    %c0_2 = arith.constant 0 : index
    %3 = vector.load %arg3[%c0, %c0_1, %c0_2] : memref<1x4x160xf32, #tpu.memory_space<vmem>>, vector<1x4x160xf32>
    %c0_3 = arith.constant 0 : index
    %c0_4 = arith.constant 0 : index
    %c0_5 = arith.constant 0 : index
    %4 = vector.load %arg4[%c0_3, %c0_4, %c0_5] : memref<1x128x160xf32, #tpu.memory_space<vmem>>, vector<1x128x160xf32>
    %c0_6 = arith.constant 0 : index
    %c0_7 = arith.constant 0 : index
    %c0_8 = arith.constant 0 : index
    %5 = vector.load %arg5[%c0_6, %c0_7, %c0_8] : memref<1x128x160xf32, #tpu.memory_space<vmem>>, vector<1x128x160xf32>
    %cst = arith.constant dense<0.000000e+00> : vector<1x4x128xf32>
    %6 = tpu.matmul %3, %4, %cst {dimension_numbers = #tpu.dot_dimension_numbers<[2], [2], [1], [1], [0, 0, 0, 1, 1, 1], [0], [0]>} : vector<1x4x160xf32>, vector<1x128x160xf32>, vector<1x4x128xf32> -> vector<1x4x128xf32>
    %c0_9 = arith.constant 0 : index
    %c0_10 = arith.constant 0 : index
    %c0_11 = arith.constant 0 : index
    %7 = vector.load %arg7[%c0_9, %c0_10, %c0_11] : memref<1x4x1xf32, #tpu.memory_space<vmem>>, vector<1x4x1xf32>
    %cst_12 = arith.constant dense<0xFF800000> : vector<1x4xf32>
    %8 = vector.multi_reduction <maximumf>, %6, %cst_12 [2] : vector<1x4x128xf32> to vector<1x4xf32>
    %9 = vector.shape_cast %8 : vector<1x4xf32> to vector<1x4x1xf32>
    %10 = arith.maximumf %7, %9 : vector<1x4x1xf32>
    %11 = arith.subf %7, %10 : vector<1x4x1xf32>
    %12 = math.exp %11 : vector<1x4x1xf32>
    %13 = vector.broadcast %10 : vector<1x4x1xf32> to vector<1x4x128xf32>
    %14 = arith.subf %6, %13 : vector<1x4x128xf32>
    %15 = math.exp %14 : vector<1x4x128xf32>
    %c0_13 = arith.constant 0 : index
    %c0_14 = arith.constant 0 : index
    %c0_15 = arith.constant 0 : index
    %16 = vector.load %arg8[%c0_13, %c0_14, %c0_15] : memref<1x4x1xf32, #tpu.memory_space<vmem>>, vector<1x4x1xf32>
    %17 = arith.mulf %12, %16 : vector<1x4x1xf32>
    %cst_16 = arith.constant dense<0.000000e+00> : vector<1x4xf32>
    %18 = vector.multi_reduction <add>, %15, %cst_16 [2] : vector<1x4x128xf32> to vector<1x4xf32>
    %19 = vector.shape_cast %18 : vector<1x4xf32> to vector<1x4x1xf32>
    %20 = arith.addf %17, %19 : vector<1x4x1xf32>
    %c0_17 = arith.constant 0 : index
    %c0_18 = arith.constant 0 : index
    %c0_19 = arith.constant 0 : index
    %21 = vector.load %arg8[%c0_17, %c0_18, %c0_19] : memref<1x4x1xf32, #tpu.memory_space<vmem>>, vector<1x4x1xf32>
    tpu.vector_store %arg8[%c0_17, %c0_18, %c0_19], %20 {strides = array<i32>} : memref<1x4x1xf32, #tpu.memory_space<vmem>>, vector<1x4x1xf32>,
    %c0_20 = arith.constant 0 : index
    %c0_21 = arith.constant 0 : index
    %c0_22 = arith.constant 0 : index
    %22 = vector.load %arg9[%c0_20, %c0_21, %c0_22] : memref<1x4x160xf32, #tpu.memory_space<vmem>>, vector<1x4x160xf32>
    %23 = vector.broadcast %12 : vector<1x4x1xf32> to vector<1x4x160xf32>
    %24 = arith.mulf %23, %22 : vector<1x4x160xf32>
    %cst_23 = arith.constant dense<0.000000e+00> : vector<1x4x160xf32>
    %25 = tpu.matmul %15, %5, %cst_23 {dimension_numbers = #tpu.dot_dimension_numbers<[2], [1], [1], [2], [0, 0, 0, 1, 1, 2], [0], [0]>} : vector<1x4x128xf32>, vector<1x128x160xf32>, vector<1x4x160xf32> -> vector<1x4x160xf32>
    %26 = arith.addf %24, %25 : vector<1x4x160xf32>
    %c0_24 = arith.constant 0 : index
    %c0_25 = arith.constant 0 : index
    %c0_26 = arith.constant 0 : index
    %27 = vector.load %arg9[%c0_24, %c0_25, %c0_26] : memref<1x4x160xf32, #tpu.memory_space<vmem>>, vector<1x4x160xf32>
    tpu.vector_store %arg9[%c0_24, %c0_25, %c0_26], %26 {strides = array<i32>} : memref<1x4x160xf32, #tpu.memory_space<vmem>>, vector<1x4x160xf32>,
    %c0_27 = arith.constant 0 : index
    %c0_28 = arith.constant 0 : index
    %c0_29 = arith.constant 0 : index
    %28 = vector.load %arg7[%c0_27, %c0_28, %c0_29] : memref<1x4x1xf32, #tpu.memory_space<vmem>>, vector<1x4x1xf32>
    tpu.vector_store %arg7[%c0_27, %c0_28, %c0_29], %10 {strides = array<i32>} : memref<1x4x1xf32, #tpu.memory_space<vmem>>, vector<1x4x1xf32>,
    %c0_i32_30 = arith.constant 0 : i32
    %29 = arith.cmpi eq, %arg2, %c0_i32_30 : i32
    %30 = arith.extui %29 : i1 to i32
    %c0_i32_31 = arith.constant 0 : i32
    %31 = arith.cmpi ne, %30, %c0_i32_31 : i32
    scf.if %31 {
      %c0_32 = arith.constant 0 : index
      %c0_33 = arith.constant 0 : index
      %c0_34 = arith.constant 0 : index
      %32 = vector.load %arg8[%c0_32, %c0_33, %c0_34] : memref<1x4x1xf32, #tpu.memory_space<vmem>>, vector<1x4x1xf32>
      %c0_35 = arith.constant 0 : index
      %c0_36 = arith.constant 0 : index
      %c0_37 = arith.constant 0 : index
      %33 = vector.load %arg9[%c0_35, %c0_36, %c0_37] : memref<1x4x160xf32, #tpu.memory_space<vmem>>, vector<1x4x160xf32>
      %34 = vector.broadcast %32 : vector<1x4x1xf32> to vector<1x4x160xf32>
      %35 = arith.divf %33, %34 : vector<1x4x160xf32>
      %c0_38 = arith.constant 0 : index
      %c0_39 = arith.constant 0 : index
      %c0_40 = arith.constant 0 : index
      %36 = vector.load %arg6[%c0_38, %c0_39, %c0_40] : memref<1x4x160xf32, #tpu.memory_space<vmem>>, vector<1x4x160xf32>
      tpu.vector_store %arg6[%c0_38, %c0_39, %c0_40], %35 {strides = array<i32>} : memref<1x4x160xf32, #tpu.memory_space<vmem>>, vector<1x4x160xf32>,
    } else {
    }
    return
  }
  func.func @transform_0(%arg0: i32, %arg1: i32, %arg2: i32) -> (i32, i32, i32) {
    %c0_i32 = arith.constant 0 : i32
    %c0_i32_0 = arith.constant 0 : i32
    return %arg0, %arg1, %c0_i32 : i32, i32, i32
  }
  func.func @transform_1(%arg0: i32, %arg1: i32, %arg2: i32) -> (i32, i32, i32) {
    %c0_i32 = arith.constant 0 : i32
    %c0_i32_0 = arith.constant 0 : i32
    return %arg0, %arg2, %c0_i32 : i32, i32, i32
  }
  func.func @transform_2(%arg0: i32, %arg1: i32, %arg2: i32) -> (i32, i32, i32) {
    %c0_i32 = arith.constant 0 : i32
    %c0_i32_0 = arith.constant 0 : i32
    return %arg0, %arg2, %c0_i32 : i32, i32, i32
  }
  func.func @transform_3(%arg0: i32, %arg1: i32, %arg2: i32) -> (i32, i32, i32) {
    %c0_i32 = arith.constant 0 : i32
    %c0_i32_0 = arith.constant 0 : i32
    return %arg0, %arg1, %c0_i32 : i32, i32, i32
  }
}

</mosaic_0001>

<llo_original>
// kernel: _sdpa_impl.1
$region0: #{_sdpa_impl.1}
  #allocation0 [shape = 'u32[]', space=smem, size = 0x4, offset = 0x4, fixed_abs, tag = 'smem constant byte address 0x4 - core index']
  #allocation1 [shape = 'u32[144,128]{1,0:T(1,128)}', space=vmem, size = 0x12000, scoped, tag = 'internal scratch']
  #allocation2 [shape = 'f32[1,4,1]{2,1,0:T(4,128)}', space=vmem, size = 0x800, scoped, tag = 'scratch operand']
  #allocation3 [shape = 'f32[1,4,1]{2,1,0:T(4,128)}', space=vmem, size = 0x800, scoped, tag = 'scratch operand']
  #allocation4 [shape = 'f32[1,4,160]{2,1,0:T(4,128)}', space=vmem, size = 0x1000, scoped, tag = 'scratch operand']
  %s0 = inlined_call_operand.vmem [shape: f32[2,4,160], index: 0, kind: input, shape index: {}]
  %s1 = inlined_call_operand.vmem [shape: f32[2,128,160], index: 1, kind: input, shape index: {}]
  %s2 = inlined_call_operand.vmem [shape: f32[2,128,160], index: 2, kind: input, shape index: {}]
  %s3 = inlined_call_operand.hbm [shape: f32[2,4,160], index: 3, kind: output, shape index: {}]
  %s4 = sld [smem:[#allocation0]]
  $region53: #{_sdpa_impl.1} parent=0
    _
  %s6 = ssub.s32 1, %s4
  %s7 = scalar_select 0, %s6, %s4
  $region1: #{_sdpa_impl.1} parent=0
    #allocation5 [shape = 'u8[8192]{0}', space=vmem, size = 0x2000, scoped, tag = 'output window, operand 0']
    #allocation6 [shape = 's32[2]{0}', space=sflag, size = 0x8, scoped, tag = 'scoped memory for _sdpa_impl.1']
    %8 = vsyncpa [#allocation6], 0
    %s9 = scalar_lea.sflag [#allocation6], 1
    %10 = vsyncpa %s9, 0
    loop: start=0, step=1, limit=4
    $region2: #{_sdpa_impl.1} parent=1 // loop_pre_header
      _
    $region3: #{_sdpa_impl.1} parent=1 // loop_header
      %s12 = sphi 0, %s16
      %p13 = scmp.ge.s32.totalorder %s12, 4
      %s19 = sphi 0, %s38
      %s20 = sphi 0, %s34
      %s21 = sphi 0, %s30
      %s22 = sphi 0, %s19
      %s23 = sphi 0, %s20
      %s24 = sphi 0, %s21
      %s25 = sphi 0, %s22
      %s26 = sphi 0, %s23
      %s27 = sphi 0, %s24
      %s43 = sphi 0, %s45
      %s46 = sphi 0, %s43
      %s47 = sphi 0, %s46
      %s63 = sphi 0, %s47
      %s71 = sphi 0, %s73
      %s74 = sphi 0, %s71
      %s75 = sphi 0, %s74
      %s91 = sphi 0, %s75
      %s99 = sphi 0, %s101
      %s102 = sphi 0, %s99
      %s103 = sphi 0, %s102
      %s119 = sphi 0, %s103
      %s127 = sphi 0, %s129
      %s130 = sphi 0, %s127
      %s131 = sphi 0, %s130
      %s147 = sphi 0, %s131
    $region4: #{_sdpa_impl.1} parent=1 // loop_header_branch
      %15 = sbr.rel (%p13) target = $region8
    $region5: #{_sdpa_impl.1} parent=1 // loop_body
      %s17 = ssub.s32 %s12, 1
      %s18 = ssub.s32 %s12, 2
      %s28 = sadd.s32 1, %s21
      %p29 = scmp.ge.s32.totalorder %s28, 1
      %s30 = scalar_select %p29, 0, %s28
      %s31 = sadd.s32 1, %s20
      %s32 = scalar_select %p29, %s31, %s20
      %p33 = scmp.ge.s32.totalorder %s32, 1
      %s34 = scalar_select %p33, 0, %s32
      %s35 = sadd.s32 1, %s19
      %s36 = scalar_select %p33, %s35, %s19
      %p37 = scmp.ge.s32.totalorder %s36, 2
      %s38 = scalar_select %p37, 0, %s36
      %s39 = ssub.s32 %s19, %s38
      %s40 = ssub.s32 %s20, %s34
      %s41 = sor.u32 %s39, %s40
      %p42 = scmp.eq.s32.totalorder %s41, 0
      %s44 = sadd.s32 %s43, 1
      %s45 = scalar_select %p42, %s43, %s44
      %p48 = pneg %p42
      %p49 = scmp.eq.s32.totalorder %s12, 1
      %p50 = por %p48, %p49
      %p51 = scmp.ne.s32.totalorder %s43, %s46
      %p52 = scmp.eq.s32.totalorder %s12, 0
      %p53 = por %p51, %p52
      %p54 = scmp.ne.s32.totalorder %s43, %s46
      %p55 = scmp.eq.s32.totalorder %s17, 1
      %p56 = por %p54, %p55
      %p57 = scmp.ne.s32.totalorder %s46, %s47
      %p58 = scmp.eq.s32.totalorder %s17, 0
      %p59 = por %p57, %p58
      %p60 = scmp.ne.s32.totalorder %s46, %s47
      %p61 = scmp.eq.s32.totalorder %s18, 1
      %p62 = por %p60, %p61
      %p64 = scmp.ne.s32.totalorder %s47, %s63
      %p65 = scmp.eq.s32.totalorder %s18, 0
      %p66 = por %p64, %p65
      %s67 = ssub.s32 %s19, %s38
      %s68 = ssub.s32 %s21, %s30
      %s69 = sor.u32 %s67, %s68
      %p70 = scmp.eq.s32.totalorder %s69, 0
      %s72 = sadd.s32 %s71, 1
      %s73 = scalar_select %p70, %s71, %s72
      %p76 = pneg %p70
      %p77 = scmp.eq.s32.totalorder %s12, 1
      %p78 = por %p76, %p77
      %p79 = scmp.ne.s32.totalorder %s71, %s74
      %p80 = scmp.eq.s32.totalorder %s12, 0
      %p81 = por %p79, %p80
      %p82 = scmp.ne.s32.totalorder %s71, %s74
      %p83 = scmp.eq.s32.totalorder %s17, 1
      %p84 = por %p82, %p83
      %p85 = scmp.ne.s32.totalorder %s74, %s75
      %p86 = scmp.eq.s32.totalorder %s17, 0
      %p87 = por %p85, %p86
      %p88 = scmp.ne.s32.totalorder %s74, %s75
      %p89 = scmp.eq.s32.totalorder %s18, 1
      %p90 = por %p88, %p89
      %p92 = scmp.ne.s32.totalorder %s75, %s91
      %p93 = scmp.eq.s32.totalorder %s18, 0
      %p94 = por %p92, %p93
      %s95 = ssub.s32 %s19, %s38
      %s96 = ssub.s32 %s21, %s30
      %s97 = sor.u32 %s95, %s96
      %p98 = scmp.eq.s32.totalorder %s97, 0
      %s100 = sadd.s32 %s99, 1
      %s101 = scalar_select %p98, %s99, %s100
      %p104 = pneg %p98
      %p105 = scmp.eq.s32.totalorder %s12, 1
      %p106 = por %p104, %p105
      %p107 = scmp.ne.s32.totalorder %s99, %s102
      %p108 = scmp.eq.s32.totalorder %s12, 0
      %p109 = por %p107, %p108
      %p110 = scmp.ne.s32.totalorder %s99, %s102
      %p111 = scmp.eq.s32.totalorder %s17, 1
      %p112 = por %p110, %p111
      %p113 = scmp.ne.s32.totalorder %s102, %s103
      %p114 = scmp.eq.s32.totalorder %s17, 0
      %p115 = por %p113, %p114
      %p116 = scmp.ne.s32.totalorder %s102, %s103
      %p117 = scmp.eq.s32.totalorder %s18, 1
      %p118 = por %p116, %p117
      %p120 = scmp.ne.s32.totalorder %s103, %s119
      %p121 = scmp.eq.s32.totalorder %s18, 0
      %p122 = por %p120, %p121
      %s123 = ssub.s32 %s19, %s38
      %s124 = ssub.s32 %s20, %s34
      %s125 = sor.u32 %s123, %s124
      %p126 = scmp.eq.s32.totalorder %s125, 0
      %s128 = sadd.s32 %s127, 1
      %s129 = scalar_select %p126, %s127, %s128
      %p132 = pneg %p126
      %p133 = scmp.eq.s32.totalorder %s12, 1
      %p134 = por %p132, %p133
      %p135 = scmp.ne.s32.totalorder %s127, %s130
      %p136 = scmp.eq.s32.totalorder %s12, 0
      %p137 = por %p135, %p136
      %p138 = scmp.ne.s32.totalorder %s127, %s130
      %p139 = scmp.eq.s32.totalorder %s17, 1
      %p140 = por %p138, %p139
      %p141 = scmp.ne.s32.totalorder %s130, %s131
      %p142 = scmp.eq.s32.totalorder %s17, 0
      %p143 = por %p141, %p142
      %p144 = scmp.ne.s32.totalorder %s130, %s131
      %p145 = scmp.eq.s32.totalorder %s18, 1
      %p146 = por %p144, %p145
      %p148 = scmp.ne.s32.totalorder %s131, %s147
      %p149 = scmp.eq.s32.totalorder %s18, 0
      %p150 = por %p148, %p149
      %p151 = scmp.le.s32.totalorder 1, %s12
      %p152 = scmp.lt.s32.totalorder %s12, 3
      %p153 = pnand %p151, %p152
      %p154 = pneg %p153
      // Predicated region
      $region9: #{_sdpa_impl.1} parent=5 // pred_check
        _
      $region10: #{_sdpa_impl.1} parent=5 // pred_check_branch
        %156 = sbr.rel (%p153) target = $region12
      $region11: #{_sdpa_impl.1} parent=5 // pred_region
        %s157 = ssub.s32 %s12, 1
      $region12: #{_sdpa_impl.1} parent=5 // pred_fallthru
        _
      %p158 = scmp.lt.s32.totalorder %s12, 2
      // Predicated region
      $region13: #{_sdpa_impl.1} parent=5 // pred_check
        %p159 = pneg %p158
      $region14: #{_sdpa_impl.1} parent=5 // pred_check_branch
        %161 = sbr.rel (%p159) target = $region16
      $region15: #{_sdpa_impl.1} parent=5 // pred_region
        // Predicated region
        $region17: #{_sdpa_impl.1} parent=15 // pred_check
          %p162 = pneg %p53
        $region18: #{_sdpa_impl.1} parent=15 // pred_check_branch
          %164 = sbr.rel (%p162) target = $region20
        $region19: #{_sdpa_impl.1} parent=15 // pred_region
          %p165 = scmp.lt.s32.totalorder %s19, 1
          %s166 = scalar_select %p165, %s19, 1
          %p167 = scmp.lt.s32.totalorder %s20, 0
          %s168 = scalar_select %p167, %s20, 0
          %s169 = smul.addr %s168, 2
          %s170 = smul.addr %s166, 2
          %s171 = sadd.s32 %s169, %s170
          %s172 = smul.addr %s171, 4
          %s173 = scalar_lea.vmem %s0, %s172
        $region20: #{_sdpa_impl.1} parent=15 // pred_fallthru
          _
        // Predicated region
        $region21: #{_sdpa_impl.1} parent=15 // pred_check
          %p174 = pneg %p81
        $region22: #{_sdpa_impl.1} parent=15 // pred_check_branch
          %176 = sbr.rel (%p174) target = $region24
        $region23: #{_sdpa_impl.1} parent=15 // pred_region
          %s177 = smul.u32 16, %s21
          %p178 = scmp.lt.s32.totalorder %s19, 1
          %s179 = scalar_select %p178, %s19, 1
          %p180 = scmp.lt.s32.totalorder %s177, 15
          %s181 = scalar_select %p180, %s177, 15
          %s182 = smul.addr %s181, 2
          %s183 = smul.addr %s179, 32
          %s184 = sadd.s32 %s182, %s183
          %s185 = smul.addr %s184, 8
          %s186 = scalar_lea.vmem %s1, %s185
          %s187 = smul.u32 16, %s21
        $region24: #{_sdpa_impl.1} parent=15 // pred_fallthru
          _
        // Predicated region
        $region25: #{_sdpa_impl.1} parent=15 // pred_check
          %p188 = pneg %p109
        $region26: #{_sdpa_impl.1} parent=15 // pred_check_branch
          %190 = sbr.rel (%p188) target = $region28
        $region27: #{_sdpa_impl.1} parent=15 // pred_region
          %s191 = smul.u32 16, %s21
          %p192 = scmp.lt.s32.totalorder %s19, 1
          %s193 = scalar_select %p192, %s19, 1
          %p194 = scmp.lt.s32.totalorder %s191, 15
          %s195 = scalar_select %p194, %s191, 15
          %s196 = smul.addr %s195, 2
          %s197 = smul.addr %s193, 32
          %s198 = sadd.s32 %s196, %s197
          %s199 = smul.addr %s198, 8
          %s200 = scalar_lea.vmem %s2, %s199
          %s201 = smul.u32 16, %s21
        $region28: #{_sdpa_impl.1} parent=15 // pred_fallthru
          _
      $region16: #{_sdpa_impl.1} parent=5 // pred_fallthru
        _
      %p202 = scmp.le.s32.totalorder 1, %s12
      %p203 = scmp.lt.s32.totalorder %s12, 3
      %p204 = pnand %p202, %p203
      %p205 = pneg %p204
      // Predicated region
      $region29: #{_sdpa_impl.1} parent=5 // pred_check
        _
      $region30: #{_sdpa_impl.1} parent=5 // pred_check_branch
        %207 = sbr.rel (%p204) target = $region32
      $region31: #{_sdpa_impl.1} parent=5 // pred_region
        %s208 = ssub.s32 %s12, 1
        %p209 = scmp.lt.s32.totalorder %s22, 1
        %s210 = scalar_select %p209, %s22, 1
        %p211 = scmp.lt.s32.totalorder %s23, 0
        %s212 = scalar_select %p211, %s23, 0
        %s213 = smul.addr %s212, 2
        %s214 = smul.addr %s210, 2
        %s215 = sadd.s32 %s213, %s214
        %s216 = smul.addr %s215, 4
        %s217 = scalar_lea.vmem %s0, %s216
        %p218 = pneg %p59
        %p219 = pneg %p56
        %s220 = smul.u32 16, %s24
        %p221 = scmp.lt.s32.totalorder %s22, 1
        %s222 = scalar_select %p221, %s22, 1
        %p223 = scmp.lt.s32.totalorder %s220, 15
        %s224 = scalar_select %p223, %s220, 15
        %s225 = smul.addr %s224, 2
        %s226 = smul.addr %s222, 32
        %s227 = sadd.s32 %s225, %s226
        %s228 = smul.addr %s227, 8
        %s229 = scalar_lea.vmem %s1, %s228
        %p230 = pneg %p87
        %p231 = pneg %p84
        %s232 = smul.u32 16, %s24
        %p233 = scmp.lt.s32.totalorder %s22, 1
        %s234 = scalar_select %p233, %s22, 1
        %p235 = scmp.lt.s32.totalorder %s232, 15
        %s236 = scalar_select %p235, %s232, 15
        %s237 = smul.addr %s236, 2
        %s238 = smul.addr %s234, 32
        %s239 = sadd.s32 %s237, %s238
        %s240 = smul.addr %s239, 8
        %s241 = scalar_lea.vmem %s2, %s240
        %p242 = pneg %p115
        %p243 = pneg %p112
        %p244 = pneg %p143
        %p245 = pneg %p140
        %s246 = sand.u32 %s130, 1
        %s247 = scalar_lea.sflag [#allocation6], %s246
        %s248 = sand.u32 %s130, 1
        %s249 = smul.addr %s248, 8
        %s250 = scalar_lea.vmem [#allocation5], %s249
        %p251 = scmp.lt.s32.totalorder %s22, 1
        %s252 = scalar_select %p251, %s22, 1
        %p253 = scmp.lt.s32.totalorder %s23, 0
        %s254 = scalar_select %p253, %s23, 0
        %s255 = smul.addr %s254, 2
        %s256 = smul.addr %s252, 2
        %s257 = sadd.s32 %s255, %s256
        %s258 = smul.addr %s257, 4
        %s259 = scalar_lea.vmem %s0, %s258
        %s260 = smul.u32 16, %s24
        %p261 = scmp.lt.s32.totalorder %s22, 1
        %s262 = scalar_select %p261, %s22, 1
        %p263 = scmp.lt.s32.totalorder %s260, 15
        %s264 = scalar_select %p263, %s260, 15
        %s265 = smul.addr %s264, 2
        %s266 = smul.addr %s262, 32
        %s267 = sadd.s32 %s265, %s266
        %s268 = smul.addr %s267, 8
        %s269 = scalar_lea.vmem %s1, %s268
        %s270 = smul.u32 16, %s24
        %s271 = smul.u32 16, %s24
        %p272 = scmp.lt.s32.totalorder %s22, 1
        %s273 = scalar_select %p272, %s22, 1
        %p274 = scmp.lt.s32.totalorder %s271, 15
        %s275 = scalar_select %p274, %s271, 15
        %s276 = smul.addr %s275, 2
        %s277 = smul.addr %s273, 32
        %s278 = sadd.s32 %s276, %s277
        %s279 = smul.addr %s278, 8
        %s280 = scalar_lea.vmem %s2, %s279
        %s281 = smul.u32 16, %s24
        %p282 = scmp.eq.s32.totalorder %s24, 0
        // Predicated region
        $region33: #{_sdpa_impl.1} parent=31 // pred_check
          %p283 = pneg %p282
        $region34: #{_sdpa_impl.1} parent=31 // pred_check_branch
          %285 = sbr.rel (%p283) target = $region36
        $region35: #{_sdpa_impl.1} parent=31 // pred_region
          %vm286 = vcmask 3072
          %287 = vst.msk [vmem:[#allocation2] sm:$0xf] %vm286, -inf
          %288 = vst.msk [vmem:[#allocation3] sm:$0xf] %vm286, 0.0
          %vm289 = vcmask 1043456
          %vm290 = vcmask 261124
          %vm291 = vmor %vm290, %vm289
          %292 = vst.msk [vmem:[#allocation4] sm:$0xff] %vm291, 0.0
        $region36: #{_sdpa_impl.1} parent=31 // pred_fallthru
          _
        %v293 = vld [vmem:[%s259] sm:$0xff]
        %v294 = vld [vmem:[%s269] sm:$0xff]
        %v295 = vld [vmem:[%s269 + $0x8] sm:$0xff]
        %v296 = vld [vmem:[%s269 + $0x10] sm:$0xff]
        %v297 = vld [vmem:[%s269 + $0x18] sm:$0xff]
        %v298 = vld [vmem:[%s269 + $0x20] sm:$0xff]
        %v299 = vld [vmem:[%s269 + $0x28] sm:$0xff]
        %v300 = vld [vmem:[%s269 + $0x30] sm:$0xff]
        %v301 = vld [vmem:[%s269 + $0x38] sm:$0xff]
        %v302 = vld [vmem:[%s269 + $0x40] sm:$0xff]
        %v303 = vld [vmem:[%s269 + $0x48] sm:$0xff]
        %v304 = vld [vmem:[%s269 + $0x50] sm:$0xff]
        %v305 = vld [vmem:[%s269 + $0x58] sm:$0xff]
        %v306 = vld [vmem:[%s269 + $0x60] sm:$0xff]
        %v307 = vld [vmem:[%s269 + $0x68] sm:$0xff]
        %v308 = vld [vmem:[%s269 + $0x70] sm:$0xff]
        %v309 = vld [vmem:[%s269 + $0x78] sm:$0xff]
        %v310 = vld [vmem:[%s269 + $0x80] sm:$0xff]
        %v311 = vld [vmem:[%s269 + $0x88] sm:$0xff]
        %v312 = vld [vmem:[%s269 + $0x90] sm:$0xff]
        %v313 = vld [vmem:[%s269 + $0x98] sm:$0xff]
        %v314 = vld [vmem:[%s269 + $0xa0] sm:$0xff]
        %v315 = vld [vmem:[%s269 + $0xa8] sm:$0xff]
        %v316 = vld [vmem:[%s269 + $0xb0] sm:$0xff]
        %v317 = vld [vmem:[%s269 + $0xb8] sm:$0xff]
        %v318 = vld [vmem:[%s269 + $0xc0] sm:$0xff]
        %v319 = vld [vmem:[%s269 + $0xc8] sm:$0xff]
        %v320 = vld [vmem:[%s269 + $0xd0] sm:$0xff]
        %v321 = vld [vmem:[%s269 + $0xd8] sm:$0xff]
        %v322 = vld [vmem:[%s269 + $0xe0] sm:$0xff]
        %v323 = vld [vmem:[%s269 + $0xe8] sm:$0xff]
        %v324 = vld [vmem:[%s269 + $0xf0] sm:$0xff]
        %v325 = vld [vmem:[%s269 + $0xf8] sm:$0xff]
        %v326 = vld [vmem:[%s280] sm:$0xff]
        %v327 = vld [vmem:[%s280 + $0x8] sm:$0xff]
        %v328 = vld [vmem:[%s280 + $0x10] sm:$0xff]
        %v329 = vld [vmem:[%s280 + $0x18] sm:$0xff]
        %v330 = vld [vmem:[%s280 + $0x20] sm:$0xff]
        %v331 = vld [vmem:[%s280 + $0x28] sm:$0xff]
        %v332 = vld [vmem:[%s280 + $0x30] sm:$0xff]
        %v333 = vld [vmem:[%s280 + $0x38] sm:$0xff]
        %v334 = vld [vmem:[%s280 + $0x40] sm:$0xff]
        %v335 = vld [vmem:[%s280 + $0x48] sm:$0xff]
        %v336 = vld [vmem:[%s280 + $0x50] sm:$0xff]
        %v337 = vld [vmem:[%s280 + $0x58] sm:$0xff]
        %v338 = vld [vmem:[%s280 + $0x60] sm:$0xff]
        %v339 = vld [vmem:[%s280 + $0x68] sm:$0xff]
        %v340 = vld [vmem:[%s280 + $0x70] sm:$0xff]
        %v341 = vld [vmem:[%s280 + $0x78] sm:$0xff]
        %v342 = vld [vmem:[%s280 + $0x80] sm:$0xff]
        %v343 = vld [vmem:[%s280 + $0x88] sm:$0xff]
        %v344 = vld [vmem:[%s280 + $0x90] sm:$0xff]
        %v345 = vld [vmem:[%s280 + $0x98] sm:$0xff]
        %v346 = vld [vmem:[%s280 + $0xa0] sm:$0xff]
        %v347 = vld [vmem:[%s280 + $0xa8] sm:$0xff]
        %v348 = vld [vmem:[%s280 + $0xb0] sm:$0xff]
        %v349 = vld [vmem:[%s280 + $0xb8] sm:$0xff]
        %v350 = vld [vmem:[%s280 + $0xc0] sm:$0xff]
        %v351 = vld [vmem:[%s280 + $0xc8] sm:$0xff]
        %v352 = vld [vmem:[%s280 + $0xd0] sm:$0xff]
        %v353 = vld [vmem:[%s280 + $0xd8] sm:$0xff]
        %v354 = vld [vmem:[%s280 + $0xe0] sm:$0xff]
        %v355 = vld [vmem:[%s280 + $0xe8] sm:$0xff]
        %v356 = vld [vmem:[%s280 + $0xf0] sm:$0xff]
        %v357 = vld [vmem:[%s280 + $0xf8] sm:$0xff]
        %v359 = vcombine.high %v293, %v293
        %vm360 = vcmask 261120
        %v361 = vsel %vm360, %v359, 0
        %v364 = vsel %vm360, %v295, 0
        %v367 = vsel %vm360, %v297, 0
        %v370 = vsel %vm360, %v299, 0
        %v373 = vsel %vm360, %v301, 0
        %v376 = vsel %vm360, %v303, 0
        %v379 = vsel %vm360, %v305, 0
        %v382 = vsel %vm360, %v307, 0
        %v385 = vsel %vm360, %v309, 0
        %v388 = vsel %vm360, %v311, 0
        %v391 = vsel %vm360, %v313, 0
        %v394 = vsel %vm360, %v315, 0
        %v397 = vsel %vm360, %v317, 0
        %v400 = vsel %vm360, %v319, 0
        %v403 = vsel %vm360, %v321, 0
        %v406 = vsel %vm360, %v323, 0
        %v409 = vsel %vm360, %v325, 0
        %411 = vmatprep.subr.mxu0 %v364
        %412 = vmatpush1.xpose.msra.mxu0 %v294
        %413 = vmatprep.subr.mxu0 %v367
        %414 = vmatpush1.xpose.msra.mxu0 %v296
        %415 = vmatprep.subr.mxu0 %v370
        %416 = vmatpush1.xpose.msra.mxu0 %v298
        %417 = vmatprep.subr.mxu0 %v373
        %418 = vmatpush1.xpose.msra.mxu0 %v300
        %419 = vmatprep.subr.mxu0 %v376
        %420 = vmatpush1.xpose.msra.mxu0 %v302
        %421 = vmatprep.subr.mxu0 %v379
        %422 = vmatpush1.xpose.msra.mxu0 %v304
        %423 = vmatprep.subr.mxu0 %v382
        %424 = vmatpush1.xpose.msra.mxu0 %v306
        %425 = vmatprep.subr.mxu0 %v385
        %426 = vmatpush1.xpose.msra.mxu0 %v308
        %427 = vmatprep.subr.mxu0 %v388
        %428 = vmatpush1.xpose.msra.mxu0 %v310
        %429 = vmatprep.subr.mxu0 %v391
        %430 = vmatpush1.xpose.msra.mxu0 %v312
        %431 = vmatprep.subr.mxu0 %v394
        %432 = vmatpush1.xpose.msra.mxu0 %v314
        %433 = vmatprep.subr.mxu0 %v397
        %434 = vmatpush1.xpose.msra.mxu0 %v316
        %435 = vmatprep.subr.mxu0 %v400
        %436 = vmatpush1.xpose.msra.mxu0 %v318
        %437 = vmatprep.subr.mxu0 %v403
        %438 = vmatpush1.xpose.msra.mxu0 %v320
        %439 = vmatprep.subr.mxu0 %v406
        %440 = vmatpush1.xpose.msra.mxu0 %v322
        %441 = vmatprep.subr.mxu0 %v409
        %442 = vmatpush1.xpose.msra.mxu0 %v324
        %443 = vmatprep.subr.mxu0 0.0
        %444 = vmatpush1.xpose.msra.mxu0 0.0
        %445 = vmatprep.subr.mxu0 0.0
        %446 = vmatpush1.xpose.msra.mxu0 0.0
        %447 = vmatprep.subr.mxu0 0.0
        %448 = vmatpush1.xpose.msra.mxu0 0.0
        %449 = vmatprep.subr.mxu0 0.0
        %450 = vmatpush1.xpose.msra.mxu0 0.0
        %451 = vmatprep.subr.mxu0 0.0
        %452 = vmatpush1.xpose.msra.mxu0 0.0
        %453 = vmatprep.subr.mxu0 0.0
        %454 = vmatpush1.xpose.msra.mxu0 0.0
        %455 = vmatprep.subr.mxu0 0.0
        %456 = vmatpush1.xpose.msra.mxu0 0.0
        %457 = vmatprep.subr.mxu0 0.0
        %458 = vmatpush1.xpose.msra.mxu0 0.0
        %459 = vmatprep.subr.mxu0 0.0
        %460 = vmatpush1.xpose.msra.mxu0 0.0
        %461 = vmatprep.subr.mxu0 0.0
        %462 = vmatpush1.xpose.msra.mxu0 0.0
        %463 = vmatprep.subr.mxu0 0.0
        %464 = vmatpush1.xpose.msra.mxu0 0.0
        %465 = vmatprep.subr.mxu0 0.0
        %466 = vmatpush1.xpose.msra.mxu0 0.0
        %467 = vmatprep.subr.mxu0 0.0
        %468 = vmatpush1.xpose.msra.mxu0 0.0
        %469 = vmatprep.subr.mxu0 0.0
        %470 = vmatpush1.xpose.msra.mxu0 0.0
        %471 = vmatprep.subr.mxu0 0.0
        %472 = vmatpush1.xpose.msra.mxu0 0.0
        %473 = vmatprep.subr.mxu0 0.0
        %474 = vmatpush1.xpose.msra.mxu0 0.0
        %475 = vmatprep.mubr.f32.mxu0 %v361
        %476 = vmatmul.mubr.f32.gmra.mrb[0].mxu0 %v293
        %v477 = vpop.f32.mrb[0].mxu0
        %v478 = vadd.f32 0.0, %v477
        %v479 = vpop.f32.mrb[0].mxu0
        %480 = vdwg.mxu0
        %v481 = vld [vmem:[#allocation2] sm:$0xf]
        %vm482 = vcmask 1043456
        %v483 = vsel %vm482, %v478, -inf
        %484 = vmax.xlane.f32.xlu0 %v483
        %v485 = vpop.xlane.xlu0 %484
        %v486 = vmax.f32 %v481, %v485
        %v487 = vsub.f32 %v481, %v486
        %v488 = vmul.f32 %v487, 1.442695
        %v489 = vpow.pop %v488
        %491 = vset.pattern.permute.xlu0 0
        %492 = vperm.xlu0 %491, %v486
        %v493 = vpop.permute.xlu0 %492
        %v495 = vsub.f32 %v478, %v493
        %v496 = vmul.f32 %v495, 1.442695
        %v497 = vpow.pop %v496
        %v498 = vld [vmem:[#allocation3] sm:$0xf]
        %v499 = vmul.f32 %v489, %v498
        %v500 = vsel %vm482, %v497, 0.0
        %501 = vadd.xlane.f32.xlu0 %v500
        %v502 = vpop.xlane.xlu0 %501
        %v503 = vadd.f32 %v499, %v502
        %vm504 = vcmask 3072
        %505 = vst.msk [vmem:[#allocation3] sm:$0xf] %vm504, %v503
        %v506 = vld [vmem:[#allocation4] sm:$0xff]
        %508 = vset.pattern.permute.xlu0 0
        %509 = vperm.xlu0 %508, %v489
        %v510 = vpop.permute.xlu0 %509
        %v513 = vcombine.high %v506, %v506
        %v515 = vmul.f32 %v510, %v506
        %v516 = vmul.f32 %v510, %v513
        %517 = vmatprep.subr.mxu0 %v327
        %518 = vmatpush1.msra.mxu0 %v326
        %519 = vmatprep.subr.mxu0 %v329
        %520 = vmatpush1.msra.mxu0 %v328
        %521 = vmatprep.subr.mxu0 %v331
        %522 = vmatpush1.msra.mxu0 %v330
        %523 = vmatprep.subr.mxu0 %v333
        %524 = vmatpush1.msra.mxu0 %v332
        %525 = vmatprep.subr.mxu0 %v335
        %526 = vmatpush1.msra.mxu0 %v334
        %527 = vmatprep.subr.mxu0 %v337
        %528 = vmatpush1.msra.mxu0 %v336
        %529 = vmatprep.subr.mxu0 %v339
        %530 = vmatpush1.msra.mxu0 %v338
        %531 = vmatprep.subr.mxu0 %v341
        %532 = vmatpush1.msra.mxu0 %v340
        %533 = vmatprep.subr.mxu0 %v343
        %534 = vmatpush1.msra.mxu0 %v342
        %535 = vmatprep.subr.mxu0 %v345
        %536 = vmatpush1.msra.mxu0 %v344
        %537 = vmatprep.subr.mxu0 %v347
        %538 = vmatpush1.msra.mxu0 %v346
        %539 = vmatprep.subr.mxu0 %v349
        %540 = vmatpush1.msra.mxu0 %v348
        %541 = vmatprep.subr.mxu0 %v351
        %542 = vmatpush1.msra.mxu0 %v350
        %543 = vmatprep.subr.mxu0 %v353
        %544 = vmatpush1.msra.mxu0 %v352
        %545 = vmatprep.subr.mxu0 %v355
        %546 = vmatpush1.msra.mxu0 %v354
        %547 = vmatprep.subr.mxu0 %v357
        %548 = vmatpush1.msra.mxu0 %v356
        %549 = vmatprep.subr.mxu0 0.0
        %550 = vmatpush1.msra.mxu0 0.0
        %551 = vmatprep.subr.mxu0 0.0
        %552 = vmatpush1.msra.mxu0 0.0
        %553 = vmatprep.subr.mxu0 0.0
        %554 = vmatpush1.msra.mxu0 0.0
        %555 = vmatprep.subr.mxu0 0.0
        %556 = vmatpush1.msra.mxu0 0.0
        %557 = vmatprep.subr.mxu0 0.0
        %558 = vmatpush1.msra.mxu0 0.0
        %559 = vmatprep.subr.mxu0 0.0
        %560 = vmatpush1.msra.mxu0 0.0
        %561 = vmatprep.subr.mxu0 0.0
        %562 = vmatpush1.msra.mxu0 0.0
        %563 = vmatprep.subr.mxu0 0.0
        %564 = vmatpush1.msra.mxu0 0.0
        %565 = vmatprep.subr.mxu0 0.0
        %566 = vmatpush1.msra.mxu0 0.0
        %567 = vmatprep.subr.mxu0 0.0
        %568 = vmatpush1.msra.mxu0 0.0
        %569 = vmatprep.subr.mxu0 0.0
        %570 = vmatpush1.msra.mxu0 0.0
        %571 = vmatprep.subr.mxu0 0.0
        %572 = vmatpush1.msra.mxu0 0.0
        %573 = vmatprep.subr.mxu0 0.0
        %574 = vmatpush1.msra.mxu0 0.0
        %575 = vmatprep.subr.mxu0 0.0
        %576 = vmatpush1.msra.mxu0 0.0
        %577 = vmatprep.subr.mxu0 0.0
        %578 = vmatpush1.msra.mxu0 0.0
        %579 = vmatprep.subr.mxu0 0.0
        %580 = vmatpush1.msra.mxu0 0.0
        %581 = vmatprep.mubr.f32.mxu0 0.0
        %582 = vmatmul.mubr.f32.gmra.mrb[0].mxu0 %v497
        %v583 = vpop.f32.mrb[0].mxu0
        %v584 = vadd.f32 0.0, %v583
        %v585 = vpop.f32.mrb[0].mxu0
        %v586 = vadd.f32 0.0, %v585
        %587 = vdwg.mxu0
        %v588 = vadd.f32 %v515, %v584
        %v589 = vadd.f32 %v516, %v586
        %v592 = vcombine.low %v588, %v589
        %vm594 = vcmask 261124
        %vm595 = vmor %vm594, %vm482
        %596 = vst.msk [vmem:[#allocation4] sm:$0xff] %vm595, %v592
        %597 = vst.msk [vmem:[#allocation2] sm:$0xf] %vm504, %v486
        // Predicated region
        $region37: #{_sdpa_impl.1} parent=31 // pred_check
          %p598 = pneg %p282
        $region38: #{_sdpa_impl.1} parent=31 // pred_check_branch
          %600 = sbr.rel (%p598) target = $region40
        $region39: #{_sdpa_impl.1} parent=31 // pred_region
          %v601 = vld [vmem:[#allocation3] sm:$0xf]
          %v602 = vld [vmem:[#allocation4] sm:$0xff]
          %604 = vset.pattern.permute.xlu0 0
          %605 = vperm.xlu0 %604, %v601
          %v606 = vpop.permute.xlu0 %605
          %v608 = vunpack.c.l.s4 839922192
          %v609 = vunpack.c.0.s8 %v608
          %v610 = vlaneseq
          %v611 = vshrl.u32 %v610, 7
          %v612 = vsub.s32 %v609, %v611
          %v613 = vrot.slane %v606, %v612
          %v615 = vrcp.pop %v613
          %v616 = vmul.f32 %v602, %v615
          %617 = vst.msk [vmem:[%s250] sm:$0xff] %vm595, %v616
        $region40: #{_sdpa_impl.1} parent=31 // pred_fallthru
          _
        %s618 = sand.u32 %s130, 1
        %s619 = scalar_lea.sflag [#allocation6], %s618
        %s620 = sand.u32 %s130, 1
        %s621 = smul.addr %s620, 8
        %s622 = scalar_lea.vmem [#allocation5], %s621
        // Predicated region
        $region41: #{_sdpa_impl.1} parent=31 // pred_check
          %p623 = pneg %p140
        $region42: #{_sdpa_impl.1} parent=31 // pred_check_branch
          %625 = sbr.rel (%p623) target = $region44
        $region43: #{_sdpa_impl.1} parent=31 // pred_region
          %s627 = ssub.s32 128, 128
          %628 = vsyncadd %s619, %s627
          %s629 = smul.addr %s23, 2
          %s630 = smul.addr %s22, 2
          %s631 = sadd.s32 %s629, %s630
          %s632 = smul.addr %s631, 64
          %s633 = scalar_lea.hbm %s3, %s632
          %s635 = sshll.u32 %s622, 4
          %s636 = int_to_ptr.vmem [resolvable:$true] %s635
          %638 = dma.vmem_to_hbm [thread:$0]  %s636, 128, %s633, %s619
        $region44: #{_sdpa_impl.1} parent=31 // pred_fallthru
          _
      $region32: #{_sdpa_impl.1} parent=5 // pred_fallthru
        _
      %p639 = scmp.le.s32.totalorder 2, %s12
      // Predicated region
      $region45: #{_sdpa_impl.1} parent=5 // pred_check
        %p640 = pneg %p639
      $region46: #{_sdpa_impl.1} parent=5 // pred_check_branch
        %642 = sbr.rel (%p640) target = $region48
      $region47: #{_sdpa_impl.1} parent=5 // pred_region
        %s643 = ssub.s32 %s12, 2
        // Predicated region
        $region49: #{_sdpa_impl.1} parent=47 // pred_check
          %p644 = pneg %p146
        $region50: #{_sdpa_impl.1} parent=47 // pred_check_branch
          %646 = sbr.rel (%p644) target = $region52
        $region51: #{_sdpa_impl.1} parent=47 // pred_region
          %s647 = sand.u32 %s131, 1
          %s648 = scalar_lea.sflag [#allocation6], %s647
          %s649 = sand.u32 %s131, 1
          %s650 = smul.addr %s649, 8
          %s651 = scalar_lea.vmem [#allocation5], %s650
          %652 = dma.done %s648, 128
        $region52: #{_sdpa_impl.1} parent=47 // pred_fallthru
          _
      $region48: #{_sdpa_impl.1} parent=5 // pred_fallthru
        _
    $region6: #{_sdpa_impl.1} parent=1 // loop_footer
      %s16 = sadd.s32 1, %s12
    $region7: #{_sdpa_impl.1} parent=1 // loop_footer_branch
      %11 = sbr.rel target = $region3
    $region8: #{_sdpa_impl.1} parent=1 // loop_exit
      _
    %653 = vsyncpa [#allocation6], 1
    %s654 = scalar_lea.sflag [#allocation6], 1
    %655 = vsyncpa %s654, 1

</llo_original>
